<compile_context>
chip_gen: v7x
topology: tpu7x:2x2x1
jax: 0.10.0
libtpu: 0.0.40
codegen_flags: <defaults>
</compile_context>

<pallas_src>
import functools

import jax
import jax.numpy as jnp
from jax.experimental import pallas as pl
from jax.experimental.pallas import tpu as pltpu


# ------------------------------ helpers ------------------------------------ #

def _row_tile(h, w, itemsize, target_bytes=2 << 20):
    """Pick a row-tile height: full image if small, else a multiple of 8 whose
    (TH, W) block stays around `target_bytes` (keeps double-buffered blocks well
    under the scoped-VMEM defaults on v5e/v6e/v7x)."""
    if h * w * itemsize <= target_bytes:
        return h
    th = (target_bytes // (w * itemsize)) // 8 * 8
    return int(max(8, min(th, h)))


# ------------------------------ Brenner ------------------------------------ #

def _brenner_kernel(x_ref, o_ref, carry_ref, *, H, TH):
    i = pl.program_id(0)

    @pl.when(i == 0)
    def _():
        o_ref[0, 0] = jnp.float32(0.0)

    x = x_ref[...].astype(jnp.float32)                       # (TH, W)
    row0 = i * TH
    rows = jax.lax.broadcasted_iota(jnp.int32, (TH, 1), 0) + row0

    # Column differences (dy): zero out rows past H so padded/garbage rows add 0.
    xm = jnp.where(rows < H, x, 0.0)
    dy = xm[:, 2:] - xm[:, :-2]
    acc = jnp.sum(dy * dy)

    # Row differences (dx) fully inside this tile; mask pairs whose lower row >= H.
    dx = x[2:, :] - x[:-2, :]                                # (TH-2, W)
    dxmask = (rows[:-2, :] + 2) < H
    acc = acc + jnp.sum(jnp.where(dxmask, dx * dx, 0.0))

    # Seam pairs straddling the previous tile boundary (uses carried last 2 rows).
    @pl.when(i > 0)
    def _():
        prev = carry_ref[...]                                 # rows row0-2, row0-1
        cur2 = x[0:2, :]                                      # rows row0, row0+1
        sdx = cur2 - prev
        smask = (jax.lax.broadcasted_iota(jnp.int32, (2, 1), 0) + row0) < H
        o_ref[0, 0] += jnp.sum(jnp.where(smask, sdx * sdx, 0.0))

    o_ref[0, 0] += acc

    # Carry the last two rows of this tile for the next grid step.
    carry_ref[...] = x[TH - 2:TH, :]


def brenner(x, weight):
    H, W = x.shape
    assert H >= 2, "Brenner needs at least 2 rows"
    TH = _row_tile(H, W, x.dtype.itemsize)
    nt = pl.cdiv(H, TH)
    out = pl.pallas_call(
        functools.partial(_brenner_kernel, H=H, TH=TH),
        grid=(nt,),
        in_specs=[pl.BlockSpec((TH, W), lambda i: (i, 0))],
        out_specs=pl.BlockSpec(memory_space=pltpu.MemorySpace.SMEM),
        out_shape=jax.ShapeDtypeStruct((1, 1), jnp.float32),
        scratch_shapes=[pltpu.VMEM((2, W), jnp.float32)],
        compiler_params=pltpu.CompilerParams(dimension_semantics=("arbitrary",)),
    )(x)
    return out[0, 0] * weight


# ------------------------------ Tenenbaum ----------------------------------- #
# Sobel weights from the PyTorch module (deterministic constants, baked in):
#   Gx = [[ 2, 0, -2], [ 4, 0, -4], [ 2, 0, -2]]   (separable: [1,2,1]^T x [2,0,-2])
#   Gy = [[ 2, 4,  2], [ 0, 0,  0], [-2, -4, -2]]  (separable: [2,0,-2]^T x [1,2,1])

def _sobel_sq(win, w):
    """Separable Sobel (cross-correlation, VALID) of a (R, W) window -> sum-ready
    (R-2, W-2) gx^2 + gy^2 (un-masked)."""
    s = win[:-2, :] + 2.0 * win[1:-1, :] + win[2:, :]
    d = win[:-2, :] - win[2:, :]
    gx = 2.0 * (s[:, :-2] - s[:, 2:])
    gy = 2.0 * (d[:, :-2] + 2.0 * d[:, 1:-1] + d[:, 2:])
    return gx * gx + gy * gy


def _tenenbaum_kernel(img_ref, o_ref, carry_ref, *, H, TH):
    b = pl.program_id(0)
    i = pl.program_id(1)

    @pl.when(jnp.logical_and(b == 0, i == 0))
    def _():
        o_ref[0, 0] = jnp.float32(0.0)

    x = img_ref[0, 0].astype(jnp.float32)                    # (TH, W)
    W = x.shape[1]
    row0 = i * TH

    # In-tile output rows; mask rows whose bottom input row falls past H.
    g2 = _sobel_sq(x, W)                                     # (TH-2, W-2)
    rows = jax.lax.broadcasted_iota(jnp.int32, (TH - 2, 1), 0) + row0
    acc = jnp.sum(jnp.where((rows + 2) < H, g2, 0.0))

    # Two seam output rows straddling the previous row-tile boundary.
    @pl.when(i > 0)
    def _():
        win = jnp.concatenate([carry_ref[...], x[0:2, :]], axis=0)   # (4, W)
        sg2 = _sobel_sq(win, W)                                       # (2, W-2)
        srows = jax.lax.broadcasted_iota(jnp.int32, (2, 1), 0) + (row0 - 2)
        o_ref[0, 0] += jnp.sum(jnp.where((srows + 2) < H, sg2, 0.0))

    o_ref[0, 0] += acc

    # Carry last two rows for the next row tile (re-initialized implicitly at i==0).
    carry_ref[...] = x[TH - 2:TH, :]


def tenenbaum(img, weight):
    n, c, h, w = img.shape
    assert c == 1, "Tenenbaum expects a single input channel (NCHW with C=1)"
    assert h >= 3 and w >= 3, "3x3 valid conv needs spatial dims >= 3"
    TH = _row_tile(h, w, img.dtype.itemsize)
    nt = pl.cdiv(h, TH)
    out = pl.pallas_call(
        functools.partial(_tenenbaum_kernel, H=h, TH=TH),
        grid=(n, nt),
        in_specs=[pl.BlockSpec((1, 1, TH, w), lambda b, i: (b, 0, i, 0))],
        out_specs=pl.BlockSpec(memory_space=pltpu.MemorySpace.SMEM),
        out_shape=jax.ShapeDtypeStruct((1, 1), jnp.float32),
        scratch_shapes=[pltpu.VMEM((2, w), jnp.float32)],
        compiler_params=pltpu.CompilerParams(
            dimension_semantics=("arbitrary", "arbitrary")),
    )(img)
    return out[0, 0] * weight


# ------------------------------ Variance ------------------------------------ #

def _variance_kernel(x_ref, psum_ref, psq_ref):
    x = x_ref[...].astype(jnp.float32)
    psum_ref[0, 0, 0] = jnp.sum(x)
    psq_ref[0, 0, 0] = jnp.sum(x * x)


def variance(x, weight):
    # TODO(synk): single-pass sum/sumsq can lose precision for very large,
    # high-mean inputs; a shifted / Welford-style combine would be more robust.
    flat = x.reshape(-1)
    n = flat.size
    LW = 1024                      # lanes per row (multiple of 128)
    rows = -(-n // LW)
    if rows <= 256:
        TR, nt = rows, 1
    else:
        TR = 256
        nt = -(-rows // TR)
        rows = nt * TR
    pad = rows * LW - n
    if pad:
        flat = jnp.pad(flat, (0, pad))        # zeros: do not affect sum / sumsq
    x2d = flat.reshape(rows, LW)

    psum, psq = pl.pallas_call(
        _variance_kernel,
        grid=(nt,),
        in_specs=[pl.BlockSpec((TR, LW), lambda i: (i, 0))],
        out_specs=(pl.BlockSpec((1, 1, 1), lambda i: (i, 0, 0)),
                   pl.BlockSpec((1, 1, 1), lambda i: (i, 0, 0))),
        out_shape=(jax.ShapeDtypeStruct((nt, 1, 1), jnp.float32),
                   jax.ShapeDtypeStruct((nt, 1, 1), jnp.float32)),
        compiler_params=pltpu.CompilerParams(dimension_semantics=("parallel",)),
    )(x2d)

    s = jnp.sum(psum)
    q = jnp.sum(psq)
    nf = jnp.float32(n)
    # torch.Tensor.var() default: unbiased (N-1 denominator)
    return (q - s * s / nf) / (nf - 1.0) * weight


# ------------------------------ Sharpness ----------------------------------- #

class Sharpness:
    def __init__(self, function, weight):
        if function == "Brenner":
            self._fn = functools.partial(brenner, weight=weight)
        elif function == "Tenenbaum":
            self._fn = functools.partial(tenenbaum, weight=weight)
        elif function == "Variance":
            self._fn = functools.partial(variance, weight=weight)
        else:
            self._fn = None

    def __call__(self, x):
        if self._fn is None:
            return 0.0
        return self._fn(x)


# ------------------------------ main ---------------------------------------- #

if __name__ == "__main__":
    key = jax.random.PRNGKey(0)
    k1, k2, k3 = jax.random.split(key, 3)
    weight = 0.5

    # Brenner: a single 2-D image
    xb = jax.random.normal(k1, (16, 16), jnp.float32)
    out_b = Sharpness("Brenner", weight)(xb)

    # Tenenbaum: NCHW with a single channel
    xt = jax.random.normal(k2, (2, 1, 16, 16), jnp.float32)
    out_t = Sharpness("Tenenbaum", weight)(xt)

    # Variance: arbitrary tensor
    xv = jax.random.normal(k3, (2, 4, 16, 16), jnp.float32)
    out_v = Sharpness("Variance", weight)(xv)

    jax.block_until_ready((out_b, out_t, out_v))

    # ---- pure-JAX references (correctness check) ----
    ref_b = (jnp.sum((xb[2:, :] - xb[:-2, :]) ** 2)
             + jnp.sum((xb[:, 2:] - xb[:, :-2]) ** 2)) * weight

    Gx = jnp.array([[2.0, 0.0, -2.0], [4.0, 0.0, -4.0], [2.0, 0.0, -2.0]])
    Gy = jnp.array([[2.0, 4.0, 2.0], [0.0, 0.0, 0.0], [-2.0, -4.0, -2.0]])
    G = jnp.stack([Gx, Gy])[:, None]  # (2, 1, 3, 3) OIHW
    conv = jax.lax.conv_general_dilated(
        xt, G, window_strides=(1, 1), padding="VALID",
        dimension_numbers=("NCHW", "OIHW", "NCHW"))
    ref_t = jnp.sum(conv ** 2) * weight

    ref_v = jnp.var(xv, ddof=1) * weight

    assert jnp.allclose(out_b, ref_b, rtol=1e-4, atol=1e-4), (out_b, ref_b)
    assert jnp.allclose(out_t, ref_t, rtol=1e-4, atol=1e-4), (out_t, ref_t)
    assert jnp.allclose(out_v, ref_v, rtol=1e-4, atol=1e-4), (out_v, ref_v)

    # Unknown function -> 0.0 (same as the PyTorch module)
    assert Sharpness("unknown", weight)(xv) == 0.0

    print("KERNEL_OK")
</pallas_src>

<mosaic_0001>
module attributes {stable_mosaic.version = 11 : i64} {
  func.func @_brenner_kernel(%arg0: i32, %arg1: memref<16x16xf32, #tpu.memory_space<vmem>>, %arg2: memref<1x1xf32, #tpu.memory_space<smem>>, %arg3: memref<2x16xf32, #tpu.memory_space<vmem>>) attributes {dimension_semantics = [#tpu.dimension_semantics<arbitrary>], iteration_bounds = array<i64: 1>, scalar_prefetch = 0 : i64, scratch_operands = 1 : i64, tpu.core_type = #tpu.core_type<tc>, window_params = [{transform_indices = @transform_0, window_bounds = array<i64: 16, 16>}, {transform_indices = @transform_1, window_bounds = array<i64: 1, 1>}]} {
    %c0_i32 = arith.constant 0 : i32
    %0 = arith.cmpi eq, %arg0, %c0_i32 : i32
    %1 = arith.extui %0 : i1 to i32
    %c0_i32_0 = arith.constant 0 : i32
    %2 = arith.cmpi ne, %1, %c0_i32_0 : i32
    scf.if %2 {
      %cst_15 = arith.constant 0.000000e+00 : f32
      %c0_16 = arith.constant 0 : index
      %c0_17 = arith.constant 0 : index
      %48 = memref.load %arg2[%c0_16, %c0_17] : memref<1x1xf32, #tpu.memory_space<smem>>
      memref.store %cst_15, %arg2[%c0_16, %c0_17] : memref<1x1xf32, #tpu.memory_space<smem>>
    } else {
    }
    %c0 = arith.constant 0 : index
    %c0_1 = arith.constant 0 : index
    %3 = vector.load %arg1[%c0, %c0_1] : memref<16x16xf32, #tpu.memory_space<vmem>>, vector<16x16xf32>
    %c16_i32 = arith.constant 16 : i32
    %4 = arith.muli %arg0, %c16_i32 : i32
    %5 = tpu.iota {dimensions = array<i32: 0>} : vector<16x1xi32>
    %6 = vector.broadcast %4 : i32 to vector<16x1xi32>
    %7 = arith.addi %5, %6 : vector<16x1xi32>
    %c16_i32_2 = arith.constant 16 : i32
    %8 = vector.broadcast %c16_i32_2 : i32 to vector<16x1xi32>
    %9 = arith.cmpi slt, %7, %8 : vector<16x1xi32>
    %cst = arith.constant 0.000000e+00 : f32
    %10 = vector.shape_cast %9 : vector<16x1xi1> to vector<16x1xi1>
    %11 = vector.broadcast %10 : vector<16x1xi1> to vector<16x16xi1>
    %12 = vector.broadcast %cst : f32 to vector<16x16xf32>
    %13 = arith.select %11, %3, %12 : vector<16x16xi1>, vector<16x16xf32>
    %14 = vector.extract_strided_slice %13 {offsets = [0, 2], sizes = [16, 14], strides = [1, 1]} : vector<16x16xf32> to vector<16x14xf32>
    %15 = vector.extract_strided_slice %13 {offsets = [0, 0], sizes = [16, 14], strides = [1, 1]} : vector<16x16xf32> to vector<16x14xf32>
    %16 = arith.subf %14, %15 : vector<16x14xf32>
    %17 = arith.mulf %16, %16 : vector<16x14xf32>
    %18 = vector.shape_cast %17 : vector<16x14xf32> to vector<1x16x14xf32>
    %cst_3 = arith.constant dense<0.000000e+00> : vector<1xf32>
    %19 = vector.multi_reduction <add>, %18, %cst_3 [1, 2] : vector<1x16x14xf32> to vector<1xf32>
    %20 = vector.shape_cast %19 : vector<1xf32> to vector<1x1x1xf32>
    %21 = vector.extract %20[0, 0, 0] : f32 from vector<1x1x1xf32>
    %22 = vector.extract_strided_slice %3 {offsets = [2, 0], sizes = [14, 16], strides = [1, 1]} : vector<16x16xf32> to vector<14x16xf32>
    %23 = vector.extract_strided_slice %3 {offsets = [0, 0], sizes = [14, 16], strides = [1, 1]} : vector<16x16xf32> to vector<14x16xf32>
    %24 = arith.subf %22, %23 : vector<14x16xf32>
    %25 = vector.extract_strided_slice %7 {offsets = [0, 0], sizes = [14, 1], strides = [1, 1]} : vector<16x1xi32> to vector<14x1xi32>
    %c2_i32 = arith.constant 2 : i32
    %26 = vector.broadcast %c2_i32 : i32 to vector<14x1xi32>
    %27 = arith.addi %25, %26 : vector<14x1xi32>
    %c16_i32_4 = arith.constant 16 : i32
    %28 = vector.broadcast %c16_i32_4 : i32 to vector<14x1xi32>
    %29 = arith.cmpi slt, %27, %28 : vector<14x1xi32>
    %30 = arith.mulf %24, %24 : vector<14x16xf32>
    %cst_5 = arith.constant 0.000000e+00 : f32
    %31 = vector.shape_cast %29 : vector<14x1xi1> to vector<14x1xi1>
    %32 = vector.broadcast %31 : vector<14x1xi1> to vector<14x16xi1>
    %33 = vector.broadcast %cst_5 : f32 to vector<14x16xf32>
    %34 = arith.select %32, %30, %33 : vector<14x16xi1>, vector<14x16xf32>
    %35 = vector.shape_cast %34 : vector<14x16xf32> to vector<1x14x16xf32>
    %cst_6 = arith.constant dense<0.000000e+00> : vector<1xf32>
    %36 = vector.multi_reduction <add>, %35, %cst_6 [1, 2] : vector<1x14x16xf32> to vector<1xf32>
    %37 = vector.shape_cast %36 : vector<1xf32> to vector<1x1x1xf32>
    %38 = vector.extract %37[0, 0, 0] : f32 from vector<1x1x1xf32>
    %39 = arith.addf %21, %38 : f32
    %c0_i32_7 = arith.constant 0 : i32
    %40 = arith.cmpi sgt, %arg0, %c0_i32_7 : i32
    %41 = arith.extui %40 : i1 to i32
    %c0_i32_8 = arith.constant 0 : i32
    %42 = arith.cmpi ne, %41, %c0_i32_8 : i32
    scf.if %42 {
      %c0_15 = arith.constant 0 : index
      %c0_16 = arith.constant 0 : index
      %48 = vector.load %arg3[%c0_15, %c0_16] : memref<2x16xf32, #tpu.memory_space<vmem>>, vector<2x16xf32>
      %49 = vector.extract_strided_slice %3 {offsets = [0, 0], sizes = [2, 16], strides = [1, 1]} : vector<16x16xf32> to vector<2x16xf32>
      %50 = arith.subf %49, %48 : vector<2x16xf32>
      %51 = tpu.iota {dimensions = array<i32: 0>} : vector<2x1xi32>
      %52 = vector.broadcast %4 : i32 to vector<2x1xi32>
      %53 = arith.addi %51, %52 : vector<2x1xi32>
      %c16_i32_17 = arith.constant 16 : i32
      %54 = vector.broadcast %c16_i32_17 : i32 to vector<2x1xi32>
      %55 = arith.cmpi slt, %53, %54 : vector<2x1xi32>
      %c0_18 = arith.constant 0 : index
      %c0_19 = arith.constant 0 : index
      %56 = memref.load %arg2[%c0_18, %c0_19] : memref<1x1xf32, #tpu.memory_space<smem>>
      %57 = arith.mulf %50, %50 : vector<2x16xf32>
      %cst_20 = arith.constant 0.000000e+00 : f32
      %58 = vector.shape_cast %55 : vector<2x1xi1> to vector<2x1xi1>
      %59 = vector.broadcast %58 : vector<2x1xi1> to vector<2x16xi1>
      %60 = vector.broadcast %cst_20 : f32 to vector<2x16xf32>
      %61 = arith.select %59, %57, %60 : vector<2x16xi1>, vector<2x16xf32>
      %62 = vector.shape_cast %61 : vector<2x16xf32> to vector<1x2x16xf32>
      %cst_21 = arith.constant dense<0.000000e+00> : vector<1xf32>
      %63 = vector.multi_reduction <add>, %62, %cst_21 [1, 2] : vector<1x2x16xf32> to vector<1xf32>
      %64 = vector.shape_cast %63 : vector<1xf32> to vector<1x1x1xf32>
      %65 = vector.extract %64[0, 0, 0] : f32 from vector<1x1x1xf32>
      %66 = arith.addf %56, %65 : f32
      %c0_22 = arith.constant 0 : index
      %c0_23 = arith.constant 0 : index
      %67 = memref.load %arg2[%c0_22, %c0_23] : memref<1x1xf32, #tpu.memory_space<smem>>
      memref.store %66, %arg2[%c0_22, %c0_23] : memref<1x1xf32, #tpu.memory_space<smem>>
    } else {
    }
    %c0_9 = arith.constant 0 : index
    %c0_10 = arith.constant 0 : index
    %43 = memref.load %arg2[%c0_9, %c0_10] : memref<1x1xf32, #tpu.memory_space<smem>>
    %44 = arith.addf %43, %39 : f32
    %c0_11 = arith.constant 0 : index
    %c0_12 = arith.constant 0 : index
    %45 = memref.load %arg2[%c0_11, %c0_12] : memref<1x1xf32, #tpu.memory_space<smem>>
    memref.store %44, %arg2[%c0_11, %c0_12] : memref<1x1xf32, #tpu.memory_space<smem>>
    %46 = vector.extract_strided_slice %3 {offsets = [14, 0], sizes = [2, 16], strides = [1, 1]} : vector<16x16xf32> to vector<2x16xf32>
    %c0_13 = arith.constant 0 : index
    %c0_14 = arith.constant 0 : index
    %47 = vector.load %arg3[%c0_13, %c0_14] : memref<2x16xf32, #tpu.memory_space<vmem>>, vector<2x16xf32>
    tpu.vector_store %arg3[%c0_13, %c0_14], %46 {strides = array<i32>} : memref<2x16xf32, #tpu.memory_space<vmem>>, vector<2x16xf32>,
    return
  }
  func.func @transform_0(%arg0: i32) -> (i32, i32) {
    %c0_i32 = arith.constant 0 : i32
    %c0_i32_0 = arith.constant 0 : i32
    return %arg0, %c0_i32 : i32, i32
  }
  func.func @transform_1(%arg0: i32) -> (i32, i32) {
    %c0_i32 = arith.constant 0 : i32
    %c0_i32_0 = arith.constant 0 : i32
    %c0_i32_1 = arith.constant 0 : i32
    return %c0_i32, %c0_i32_0 : i32, i32
  }
}

</mosaic_0001>

<llo_original>
// kernel: tpu_custom_call.1
$region0: #{tpu_custom_call.1}
  #allocation0 [shape = 'u32[]', space=smem, size = 0x4, offset = 0x4, fixed_abs, tag = 'smem constant byte address 0x4 - core index']
  #allocation1 [shape = 'u32[144,128]{1,0:T(1,128)}', space=vmem, size = 0x12000, scoped, tag = 'internal scratch']
  #allocation2 [shape = 'f32[2,16]{1,0:T(2,128)}', space=vmem, size = 0x400, scoped, tag = 'scratch operand']
  %s0 = inlined_call_operand.hbm [shape: f32[16,16], index: 0, kind: input, shape index: {}]
  %s1 = inlined_call_operand.hbm [shape: f32[1,1], index: 1, kind: output, shape index: {}]
  %s2 = sld [smem:[#allocation0]]
  $region26: #{tpu_custom_call.1} parent=0
    _
  %s4 = ssub.s32 1, %s2
  %s5 = scalar_select 0, %s4, %s2
  $region1: #{tpu_custom_call.1} parent=0
    #allocation3 [shape = 'u8[8192]{0}', space=vmem, size = 0x2000, scoped, tag = 'input window, operand 0, single buffered']
    #allocation4 [shape = 's32[1]{0}', space=sflag, size = 0x4, scoped, tag = 'scoped memory for tpu_custom_call.1']
    #allocation5 [shape = 's32[1]{0}', space=sflag, size = 0x4, scoped, tag = 'scoped memory for tpu_custom_call.1']
    #allocation6 [shape = 'u8[512]{0}', space=smem, size = 0x200, scoped, tag = 'output window, operand 0, single buffered']
    %6 = vsyncpa [#allocation4], 0
    %7 = vsyncpa [#allocation5], 0
    // Predicated region
    $region2: #{tpu_custom_call.1} parent=1 // pred_check
      _
    $region3: #{tpu_custom_call.1} parent=1 // pred_check_branch
      %9 = sbr.rel (0) target = $region5
    $region4: #{tpu_custom_call.1} parent=1 // pred_region
      %s11 = ssub.s32 256, 256
      %12 = vsyncadd [#allocation4], %s11
      %s13 = sshll.u32 [#allocation3], 4
      %s14 = int_to_ptr.vmem [resolvable:$true] %s13
      %19 = dma.hbm_to_vmem [thread:$0]  %s0, 256, %s14, [#allocation4], 128, 128, 8
    $region5: #{tpu_custom_call.1} parent=1 // pred_fallthru
      _
    // Predicated region
    $region6: #{tpu_custom_call.1} parent=1 // pred_check
      _
    $region7: #{tpu_custom_call.1} parent=1 // pred_check_branch
      %21 = sbr.rel (0) target = $region9
    $region8: #{tpu_custom_call.1} parent=1 // pred_region
      %22 = dma.done [#allocation4], 256
    $region9: #{tpu_custom_call.1} parent=1 // pred_fallthru
      _
    %p23 = scmp.eq.s32.totalorder 0, 0
    // Predicated region
    $region10: #{tpu_custom_call.1} parent=1 // pred_check
      %p24 = pneg %p23
    $region11: #{tpu_custom_call.1} parent=1 // pred_check_branch
      %26 = sbr.rel (%p24) target = $region13
    $region12: #{tpu_custom_call.1} parent=1 // pred_region
      %s27 = scalar_lea.smem [#allocation6], 0
      %28 = sst [smem:[%s27]] 0.0
    $region13: #{tpu_custom_call.1} parent=1 // pred_fallthru
      _
    %v29 = vld [vmem:[#allocation3] sm:$0xff]
    %v30 = vld [vmem:[#allocation3 + $0x8] sm:$0xff]
    %s31 = smul.u32 0, 16
    %v32 = vlaneseq
    %v33 = vshrl.u32 %v32, 7
    %v34 = vadd.s32 %v33, 8
    %v35 = vstv %s31
    %v36 = vadd.s32 %v33, %v35
    %v37 = vadd.s32 %v34, %v35
    %vm38 = vcmp.lt.s32.totalorder %v36, 16
    %vm39 = vcmp.lt.s32.totalorder %v37, 16
    %v40 = vsel %vm38, 1, 0
    %v41 = vsel %vm39, 1, 0
    %vm42 = vcmp.eq.s32.totalorder %v40, 1
    %vm43 = vcmp.eq.s32.totalorder %v41, 1
    %v44 = vsel %vm42, %v29, 0.0
    %v45 = vsel %vm43, %v30, 0.0
    %48 = vrot.lane.b32.xlu0 %v44, 2
    %v49 = vpop.permute.xlu0 %48
    %50 = vrot.lane.b32.xlu0 %v45, 2
    %v51 = vpop.permute.xlu0 %50
    %v54 = vsub.f32 %v44, %v49
    %v55 = vsub.f32 %v45, %v51
    %v56 = vmul.f32 %v54, %v54
    %v57 = vmul.f32 %v55, %v55
    %60 = vrot.lane.b32.xlu0 %v56, 126
    %v61 = vpop.permute.xlu0 %60
    %62 = vrot.lane.b32.xlu0 %v57, 126
    %v63 = vpop.permute.xlu0 %62
    %vm66 = vcmask 113664
    %v67 = vsel %vm66, %v61, 0.0
    %v68 = vsel %vm66, %v63, 0.0
    %v69 = vadd.f32 %v67, %v68
    %70 = vadd.xlane.f32.xlu0 %v69
    %v71 = vpop.xlane.xlu0 %70
    %v72 = vrot.slane %v71, 4
    %v73 = vadd.f32 %v71, %v72
    %v74 = vrot.slane %v73, 2
    %v75 = vadd.f32 %v73, %v74
    %v76 = vrot.slane %v75, 1
    %v77 = vadd.f32 %v75, %v76
    %s78 = vtos %v77
    %vm81 = vcmask 1041408
    %v82 = vrot.slane %v29, 6
    %v83 = vrot.slane %v30, 6
    %v84 = vsel %vm81, %v82, %v83
    %v87 = vsub.f32 %v29, %v82
    %v88 = vsub.f32 %v30, %v84
    %v89 = vadd.s32 %v36, 2
    %v90 = vadd.s32 %v37, 2
    %vm91 = vcmp.lt.s32.totalorder %v89, 16
    %vm92 = vcmp.lt.s32.totalorder %v90, 16
    %v93 = vmul.f32 %v87, %v87
    %v94 = vmul.f32 %v88, %v88
    %v95 = vsel %vm91, 1, 0
    %v96 = vsel %vm92, 1, 0
    %vm97 = vcmp.eq.s32.totalorder %v95, 1
    %vm98 = vcmp.eq.s32.totalorder %v96, 1
    %vm101 = vcmask 1045504
    %v102 = vrot.slane %v93, 2
    %v103 = vrot.slane %v94, 2
    %v104 = vsel %vm101, %v102, %v103
    %v107 = vsel %vm97, %v104, 0.0
    %v108 = vsel %vm98, %v103, 0.0
    %vm109 = vcmask 130048
    %v110 = vsel %vm109, %v107, 0.0
    %vm111 = vcmask 128000
    %v112 = vsel %vm111, %v108, 0.0
    %v113 = vadd.f32 %v110, %v112
    %114 = vadd.xlane.f32.xlu0 %v113
    %v115 = vpop.xlane.xlu0 %114
    %v116 = vrot.slane %v115, 4
    %v117 = vadd.f32 %v115, %v116
    %v118 = vrot.slane %v117, 2
    %v119 = vadd.f32 %v117, %v118
    %v120 = vrot.slane %v119, 1
    %v121 = vadd.f32 %v119, %v120
    %s122 = vtos %v121
    %s123 = sadd.f32 %s78, %s122
    %p124 = scmp.gt.s32.totalorder 0, 0
    // Predicated region
    $region14: #{tpu_custom_call.1} parent=1 // pred_check
      %p125 = pneg %p124
    $region15: #{tpu_custom_call.1} parent=1 // pred_check_branch
      %127 = sbr.rel (%p125) target = $region17
    $region16: #{tpu_custom_call.1} parent=1 // pred_region
      %v128 = vld [vmem:[#allocation2] sm:$0x3]
      %v129 = vsub.f32 %v29, %v128
      %s130 = sld [smem:[#allocation6]]
      %v131 = vmul.f32 %v129, %v129
      %v132 = vsel %vm42, %v131, 0.0
      %vm133 = vcmask 123904
      %v134 = vsel %vm133, %v132, 0.0
      %135 = vadd.xlane.f32.xlu0 %v134
      %v136 = vpop.xlane.xlu0 %135
      %v137 = vrot.slane %v136, 4
      %v138 = vadd.f32 %v136, %v137
      %v139 = vrot.slane %v138, 2
      %v140 = vadd.f32 %v138, %v139
      %v141 = vrot.slane %v140, 1
      %v142 = vadd.f32 %v140, %v141
      %s143 = vtos %v142
      %s144 = sadd.f32 %s130, %s143
      %s145 = scalar_lea.smem [#allocation6], 0
      %146 = sst [smem:[%s145]] %s144
    $region17: #{tpu_custom_call.1} parent=1 // pred_fallthru
      _
    %s147 = sld [smem:[#allocation6]]
    %s148 = sadd.f32 %s147, %s123
    %s149 = scalar_lea.smem [#allocation6], 0
    %150 = sst [smem:[%s149]] %s148
    %vm151 = vcmask 130054
    %152 = vst.msk [vmem:[#allocation2 - $0x6] sm:$0xc0] %vm151, %v30
    // Predicated region
    $region18: #{tpu_custom_call.1} parent=1 // pred_check
      _
    $region19: #{tpu_custom_call.1} parent=1 // pred_check_branch
      %154 = sbr.rel (0) target = $region21
    $region20: #{tpu_custom_call.1} parent=1 // pred_region
      %s156 = ssub.s32 16, 16
      %157 = vsyncadd [#allocation5], %s156
      %160 = dma.smem_to_hbm [#allocation6], 16, %s1, [#allocation5]
    $region21: #{tpu_custom_call.1} parent=1 // pred_fallthru
      _
    // Predicated region
    $region22: #{tpu_custom_call.1} parent=1 // pred_check
      _
    $region23: #{tpu_custom_call.1} parent=1 // pred_check_branch
      %162 = sbr.rel (0) target = $region25
    $region24: #{tpu_custom_call.1} parent=1 // pred_region
      %163 = dma.done [#allocation5], 16
    $region25: #{tpu_custom_call.1} parent=1 // pred_fallthru
      _
    %164 = sfence
    %165 = vsyncpa [#allocation4], 1
    %166 = vsyncpa [#allocation5], 1

</llo_original>
